<compile_context>
chip_gen: v7x
topology: tpu7x:2x2x1
jax: 0.10.0
libtpu: 0.0.40
codegen_flags: <defaults>
</compile_context>

<pallas_src>
import numpy as np
import jax
import jax.numpy as jnp
from jax.experimental import pallas as pl
from jax.experimental.pallas import tpu as pltpu

DELTA = 1e-06
LOG100 = float(np.log(100.0))


def _round_up(v, m):
    return ((v + m - 1) // m) * m


def _log(x):
    # replicates: torch.log(x * 100.0) - np.log(100.0)
    return jnp.log(x * 100.0) - LOG100


def _logsigmoid(x):
    # replicates: -(softplus_(x) + delta) applied to -x
    return -(jax.nn.softplus(-x) + DELTA)


def _make_kernel(in_dim, hidden_dim, out_dim, hp, ip):
    H, I, O, HP, IP = hidden_dim, in_dim, out_dim, hp, ip
    inv = float(np.log(np.exp(1.0 - DELTA) - 1.0))
    log1md = float(np.log(1.0 - DELTA))

    def kernel(slab_ref, u_p_ref, ew_p_ref, out_ref):
        # ---- unpack the stacked (features x rows) slab; each section starts on
        #      a sublane (x8) boundary so the static slices are cheap. ----
        a_raw = slab_ref[0:H, :]                            # (H, TN)
        b     = slab_ref[HP:HP + H, :]                      # (H, TN)
        w_raw = slab_ref[2 * HP:2 * HP + H, :]              # (H, TN)
        u_raw = slab_ref[3 * HP:3 * HP + I, :]              # (I, TN)
        x     = slab_ref[3 * HP + IP:3 * HP + IP + I, :]    # (I, TN)

        u_p  = u_p_ref[...]                                 # (H, I)  learned u_
        ew_p = ew_p_ref[...]                                 # (H, O)  exp(w_.T - max)

        a = jax.nn.softplus(a_raw + inv)                    # act_a, (H, TN)

        # ---- softmax over in_dim feeding pre_sigm (exact, no approx recip) ----
        if I == 2:
            # softmax over two entries == sigmoid of the difference
            d = (u_p[:, 1:2] - u_p[:, 0:1]) + (u_raw[1:2, :] - u_raw[0:1, :])
            u0 = jnp.exp(-jax.nn.softplus(d))               # sigmoid(-d), weight of i=0
            ux = x[1:2, :] + u0 * (x[0:1, :] - x[1:2, :])   # sum_i u_i * x_i
        else:
            pre = [u_p[:, i:i + 1] + u_raw[i:i + 1, :] for i in range(I)]
            m_u = pre[0]
            for p in pre[1:]:
                m_u = jnp.maximum(m_u, p)
            e_u = [jnp.exp(p - m_u) for p in pre]
            s_u = e_u[0]
            for e in e_u[1:]:
                s_u = s_u + e
            ux = e_u[0] * x[0:1, :]
            for i in range(1, I):
                ux = ux + e_u[i] * x[i:i + 1, :]
            ux = ux / s_u                                   # exact normalisation

        pre_sigm = a * ux + b                               # (H, TN)

        # ---- fused sigmoid / logsigmoid family: ONE softplus + ONE exp ----
        sp_n = jax.nn.softplus(-pre_sigm)
        sigm = jnp.exp(-sp_n)                               # sigmoid(pre_sigm)
        # logsigmoid(pre) + logsigmoid(-pre) = -(2*sp_n + pre_sigm + 2*delta)
        C = jnp.log(a) - (2.0 * sp_n + pre_sigm + 2.0 * DELTA)     # (H, TN)
        M = jnp.max(C, axis=0, keepdims=True)               # (1, TN)
        Ke = jnp.exp(C - M)                                 # single shared exp

        # ---- w softmax: exponential hoisted out of the o-loop ----
        m_wr = jnp.max(w_raw, axis=0, keepdims=True)        # (1, TN)
        Ew = jnp.exp(w_raw - m_wr)                          # (H, TN), one exp for all o

        for o in range(O):
            num = ew_p[:, o:o + 1] * Ew                     # unnormalised softmax weights
            s_w  = jnp.sum(num, axis=0, keepdims=True)      # (1, TN)
            r_sg = jnp.sum(num * sigm, axis=0, keepdims=True)
            r_ke = jnp.sum(num * Ke, axis=0, keepdims=True)
            inv_s = 1.0 / s_w                               # exact divide, (1, TN) only

            xpc = (r_sg * inv_s) * (1.0 - DELTA) + DELTA * 0.5
            log_xpc  = jnp.log(xpc)
            log_1mxp = jnp.log(1.0 - xpc)
            out_ref[o:o + 1, :] = log_xpc - log_1mxp        # xnew row o, full lane width

            # logdet (logdet=None entry): logsumexp over in_dim collapses because
            # sum_i u_i == 1 ->  log(sum_h w_o * exp(C)) + shared terms.
            # TODO(synk): chaining a previous layer's (non-None) logdet through the
            # kernel is not implemented; that path needs the per-in_dim branch.
            out_ref[O + o:O + o + 1, :] = (jnp.log(r_ke * inv_s) + (M + log1md)
                                           - (log_xpc + log_1mxp))

    return kernel


def _choose_tile(n_rows, tile_rows):
    """Pick the lane tile (multiple of 128) and the padded row count."""
    np128 = _round_up(n_rows, 128)
    tn = max(128, min(_round_up(int(tile_rows), 128), 2048))  # 2048 cap: v5e scoped VMEM
    if np128 <= tn:
        return np128, np128                    # one grid step covers everything
    # large problem: keep >= 4 grid steps so both v7x TensorCores get >= 2 each
    while tn > 128 and (np128 + tn - 1) // tn < 4:
        tn = max(128, (tn // 2) // 128 * 128)
    return tn, _round_up(n_rows, tn)


def dense_sigmoid_flow(x, dsparams, u_, w_, *, tile_rows=1024):
    """Forward pass of DenseSigmoidFlow (logdet=None case).

    x        : (B, D) or (B, D, in_dim)
    dsparams : (B, D, 3*hidden_dim + in_dim)
    u_       : (hidden_dim, in_dim)
    w_       : (out_dim, hidden_dim)
    returns  : (xnew, logdet); xnew is (B, D, out_dim) (squeezed to (B, D) when
               out_dim == 1, like torch .squeeze(-1)); logdet is (B, D, out_dim, 1).
    """
    H, I = u_.shape
    O = w_.shape[0]
    assert w_.shape[1] == H
    if x.ndim == 2:
        x = x[..., None]
    B, D, I2 = x.shape
    assert I2 == I
    assert dsparams.shape[-1] == 3 * H + I

    N = B * D
    xf = x.reshape(N, I).astype(jnp.float32)
    df = dsparams.reshape(N, 3 * H + I).astype(jnp.float32)

    HP, IP = _round_up(H, 8), _round_up(I, 8)
    R = 3 * HP + 2 * IP
    TN, Np = _choose_tile(N, tile_rows)

    # One stacked, sublane-aligned (R, Np) input slab: rows = features on the
    # sublane axis, columns = the flattened B*D problem rows on the lane axis.
    def sect(m, rows):
        k = m.shape[1]
        return m if k == rows else jnp.pad(m, ((0, 0), (0, rows - k)))

    slab = jnp.concatenate([
        sect(df[:, 0:H], HP),              # act_a pre-activation
        sect(df[:, H:2 * H], HP),          # act_b
        sect(df[:, 2 * H:3 * H], HP),      # w_raw
        sect(df[:, 3 * H:3 * H + I], IP),  # u_raw
        sect(xf, IP),                      # x
    ], axis=1).T                           # (R, N)
    if Np > N:
        slab = jnp.pad(slab, ((0, 0), (0, Np - N)))
    # TODO(synk): on v5e, feed the slab as bf16 (upcast in-kernel) if this ever
    # becomes HBM-bound; it is EUP-bound on current data, so kept f32.

    u_p = jnp.asarray(u_, jnp.float32)                       # (H, I)
    w_t = jnp.asarray(w_, jnp.float32).T                     # (H, O)
    # GLOBAL max shift (constant) -> softmax unchanged, exp stays overflow-safe.
    ew_p = jnp.exp(w_t - jnp.max(w_t))                       # (H, O)

    kernel = _make_kernel(I, H, O, HP, IP)
    out = pl.pallas_call(
        kernel,
        out_shape=jax.ShapeDtypeStruct((2 * O, Np), jnp.float32),
        grid=(Np // TN,),
        in_specs=[
            pl.BlockSpec((R, TN), lambda n: (0, n)),         # stacked input slab
            pl.BlockSpec((H, I), lambda n: (0, 0)),          # u_
            pl.BlockSpec((H, O), lambda n: (0, 0)),          # exp(w_.T - max)
        ],
        out_specs=pl.BlockSpec((2 * O, TN), lambda n: (0, n)),
        compiler_params=pltpu.CompilerParams(
            dimension_semantics=("parallel",)),
    )(slab, u_p, ew_p)

    out_x = out[:O, :N].T.reshape(B, D, O)
    out_ld = out[O:, :N].T.reshape(B, D, O)[..., None]
    if O == 1:
        out_x = out_x.reshape(B, D)                          # torch .squeeze(-1)
    return out_x, out_ld


def _reference(x, dsparams, u_, w_):
    """Pure-JAX mirror of the PyTorch forward (logdet=None path)."""
    if x.ndim == 2:
        x = x[..., None]
    H, I = u_.shape
    O = w_.shape[0]
    inv = np.log(np.exp(1.0 - DELTA) - 1.0)
    pre_u = u_[None, None, :, :] + dsparams[:, :, None, 3 * H:]
    pre_w = w_[None, None, :, :] + dsparams[:, :, None, 2 * H:3 * H]
    a = jax.nn.softplus(dsparams[:, :, 0:H] + inv)
    b = dsparams[:, :, H:2 * H]
    w = jax.nn.softmax(pre_w, axis=3)
    u = jax.nn.softmax(pre_u, axis=3)
    pre_sigm = jnp.sum(u * a[:, :, :, None] * x[:, :, None, :], axis=3) + b
    sigm = jax.nn.sigmoid(pre_sigm)
    x_pre = jnp.sum(w * sigm[:, :, None, :], axis=3)
    xpc = x_pre * (1.0 - DELTA) + DELTA * 0.5
    xnew = _log(xpc) - _log(1.0 - xpc)
    logj = (jax.nn.log_softmax(pre_w, axis=3)
            + _logsigmoid(pre_sigm)[:, :, None, :]
            + _logsigmoid(-pre_sigm)[:, :, None, :]
            + _log(a)[:, :, None, :])
    logj = logj[:, :, :, :, None] + jax.nn.log_softmax(pre_u, axis=3)[:, :, None, :, :]
    logj = jax.scipy.special.logsumexp(logj, axis=3)       # (B, D, O, I)
    logdet_ = logj + np.log(1.0 - DELTA) - (_log(xpc) + _log(1.0 - xpc))[:, :, :, None]
    logdet0 = jnp.zeros((x.shape[0], x.shape[1], 1, 1), jnp.float32)
    logdet = jax.scipy.special.logsumexp(
        logdet_[:, :, :, :, None] + logdet0[:, :, None, :, :], axis=3)  # (B,D,O,1)
    if O == 1:
        xnew = xnew.reshape(xnew.shape[0], xnew.shape[1])
    return xnew, logdet


if __name__ == "__main__":
    key = jax.random.PRNGKey(0)
    B, D = 2, 8
    in_dim, hidden_dim, out_dim = 2, 16, 3
    P = 3 * hidden_dim + in_dim

    k1, k2, k3, k4 = jax.random.split(key, 4)
    # parameters: uniform(-0.001, 0.001), matching reset_parameters()
    u_ = jax.random.uniform(k1, (hidden_dim, in_dim), jnp.float32, -0.001, 0.001)
    w_ = jax.random.uniform(k2, (out_dim, hidden_dim), jnp.float32, -0.001, 0.001)
    x = jax.random.normal(k3, (B, D, in_dim), jnp.float32)
    dsparams = 0.5 * jax.random.normal(k4, (B, D, P), jnp.float32)

    xnew, logdet = dense_sigmoid_flow(x, dsparams, u_, w_)
    jax.block_until_ready((xnew, logdet))

    x_ref, ld_ref = _reference(x, dsparams, u_, w_)
    assert xnew.shape == x_ref.shape, (xnew.shape, x_ref.shape)
    assert logdet.shape == ld_ref.shape, (logdet.shape, ld_ref.shape)
    # No approximate reciprocals remain; the only differences vs the reference
    # are exact algebraic rewrites (sigmoid identity, exp hoist, logsumexp
    # collapse) plus float reassociation -> expected error ~1e-5; check at 2e-3.
    assert np.allclose(np.asarray(xnew), np.asarray(x_ref), rtol=2e-3, atol=2e-3)
    assert np.allclose(np.asarray(logdet), np.asarray(ld_ref), rtol=2e-3, atol=2e-3)
    print("KERNEL_OK")
</pallas_src>

<mosaic_0001>
module attributes {stable_mosaic.version = 11 : i64} {
  func.func @kernel(%arg0: i32, %arg1: memref<64x128xf32, #tpu.memory_space<vmem>>, %arg2: memref<16x2xf32, #tpu.memory_space<vmem>>, %arg3: memref<16x3xf32, #tpu.memory_space<vmem>>, %arg4: memref<6x128xf32, #tpu.memory_space<vmem>>) attributes {dimension_semantics = [#tpu.dimension_semantics<parallel>], iteration_bounds = array<i64: 1>, scalar_prefetch = 0 : i64, scratch_operands = 0 : i64, tpu.core_type = #tpu.core_type<tc>, window_params = [{transform_indices = @transform_0, window_bounds = array<i64: 64, 128>}, {pipeline_mode = #tpu.pipeline_mode<synchronous>, transform_indices = @transform_1, window_bounds = array<i64: 16, 2>}, {pipeline_mode = #tpu.pipeline_mode<synchronous>, transform_indices = @transform_2, window_bounds = array<i64: 16, 3>}, {transform_indices = @transform_3, window_bounds = array<i64: 6, 128>}]} {
    %c0 = arith.constant 0 : index
    %c0_0 = arith.constant 0 : index
    %0 = vector.load %arg1[%c0, %c0_0] : memref<64x128xf32, #tpu.memory_space<vmem>>, vector<16x128xf32>
    %c16 = arith.constant 16 : index
    %c0_1 = arith.constant 0 : index
    %1 = vector.load %arg1[%c16, %c0_1] : memref<64x128xf32, #tpu.memory_space<vmem>>, vector<16x128xf32>
    %c32 = arith.constant 32 : index
    %c0_2 = arith.constant 0 : index
    %2 = vector.load %arg1[%c32, %c0_2] : memref<64x128xf32, #tpu.memory_space<vmem>>, vector<16x128xf32>
    %c48 = arith.constant 48 : index
    %c0_3 = arith.constant 0 : index
    %3 = vector.load %arg1[%c48, %c0_3] : memref<64x128xf32, #tpu.memory_space<vmem>>, vector<2x128xf32>
    %c56 = arith.constant 56 : index
    %c0_4 = arith.constant 0 : index
    %4 = vector.load %arg1[%c56, %c0_4] : memref<64x128xf32, #tpu.memory_space<vmem>>, vector<2x128xf32>
    %c0_5 = arith.constant 0 : index
    %c0_6 = arith.constant 0 : index
    %5 = vector.load %arg2[%c0_5, %c0_6] : memref<16x2xf32, #tpu.memory_space<vmem>>, vector<16x2xf32>
    %c0_7 = arith.constant 0 : index
    %c0_8 = arith.constant 0 : index
    %6 = vector.load %arg3[%c0_7, %c0_8] : memref<16x3xf32, #tpu.memory_space<vmem>>, vector<16x3xf32>
    %cst = arith.constant 0.541323245 : f32
    %7 = vector.broadcast %cst : f32 to vector<16x128xf32>
    %8 = arith.addf %0, %7 : vector<16x128xf32>
    %cst_9 = arith.constant 0.000000e+00 : f32
    %9 = vector.broadcast %cst_9 : f32 to vector<16x128xf32>
    %10 = arith.maximumf %8, %9 : vector<16x128xf32>
    %11 = vector.broadcast %cst_9 : f32 to vector<16x128xf32>
    %12 = arith.subf %8, %11 : vector<16x128xf32>
    %13 = arith.cmpf one, %12, %12 : vector<16x128xf32>
    %14 = vector.broadcast %cst_9 : f32 to vector<16x128xf32>
    %15 = arith.addf %8, %14 : vector<16x128xf32>
    %16 = math.absf %12 : vector<16x128xf32>
    %cst_10 = arith.constant 0.000000e+00 : f32
    %17 = vector.broadcast %cst_10 : f32 to vector<16x128xf32>
    %18 = arith.subf %17, %16 : vector<16x128xf32>
    %19 = math.exp %18 : vector<16x128xf32>
    %20 = math.log1p %19 : vector<16x128xf32>
    %21 = arith.addf %10, %20 : vector<16x128xf32>
    %22 = arith.select %13, %15, %21 : vector<16x128xi1>, vector<16x128xf32>
    %23 = vector.extract_strided_slice %5 {offsets = [0, 1], sizes = [16, 1], strides = [1, 1]} : vector<16x2xf32> to vector<16x1xf32>
    %24 = vector.extract_strided_slice %5 {offsets = [0, 0], sizes = [16, 1], strides = [1, 1]} : vector<16x2xf32> to vector<16x1xf32>
    %25 = arith.subf %23, %24 : vector<16x1xf32>
    %26 = vector.extract_strided_slice %3 {offsets = [1, 0], sizes = [1, 128], strides = [1, 1]} : vector<2x128xf32> to vector<1x128xf32>
    %27 = vector.extract_strided_slice %3 {offsets = [0, 0], sizes = [1, 128], strides = [1, 1]} : vector<2x128xf32> to vector<1x128xf32>
    %28 = arith.subf %26, %27 : vector<1x128xf32>
    %29 = vector.broadcast %25 : vector<16x1xf32> to vector<16x128xf32>
    %30 = vector.broadcast %28 : vector<1x128xf32> to vector<16x128xf32>
    %31 = arith.addf %29, %30 : vector<16x128xf32>
    %cst_11 = arith.constant 0.000000e+00 : f32
    %32 = vector.broadcast %cst_11 : f32 to vector<16x128xf32>
    %33 = arith.maximumf %31, %32 : vector<16x128xf32>
    %34 = vector.broadcast %cst_11 : f32 to vector<16x128xf32>
    %35 = arith.subf %31, %34 : vector<16x128xf32>
    %36 = arith.cmpf one, %35, %35 : vector<16x128xf32>
    %37 = vector.broadcast %cst_11 : f32 to vector<16x128xf32>
    %38 = arith.addf %31, %37 : vector<16x128xf32>
    %39 = math.absf %35 : vector<16x128xf32>
    %cst_12 = arith.constant 0.000000e+00 : f32
    %40 = vector.broadcast %cst_12 : f32 to vector<16x128xf32>
    %41 = arith.subf %40, %39 : vector<16x128xf32>
    %42 = math.exp %41 : vector<16x128xf32>
    %43 = math.log1p %42 : vector<16x128xf32>
    %44 = arith.addf %33, %43 : vector<16x128xf32>
    %45 = arith.select %36, %38, %44 : vector<16x128xi1>, vector<16x128xf32>
    %cst_13 = arith.constant 0.000000e+00 : f32
    %46 = vector.broadcast %cst_13 : f32 to vector<16x128xf32>
    %47 = arith.subf %46, %45 : vector<16x128xf32>
    %48 = math.exp %47 : vector<16x128xf32>
    %49 = vector.extract_strided_slice %4 {offsets = [1, 0], sizes = [1, 128], strides = [1, 1]} : vector<2x128xf32> to vector<1x128xf32>
    %50 = vector.extract_strided_slice %4 {offsets = [0, 0], sizes = [1, 128], strides = [1, 1]} : vector<2x128xf32> to vector<1x128xf32>
    %51 = vector.extract_strided_slice %4 {offsets = [1, 0], sizes = [1, 128], strides = [1, 1]} : vector<2x128xf32> to vector<1x128xf32>
    %52 = arith.subf %50, %51 : vector<1x128xf32>
    %53 = vector.broadcast %52 : vector<1x128xf32> to vector<16x128xf32>
    %54 = arith.mulf %48, %53 : vector<16x128xf32>
    %55 = vector.broadcast %49 : vector<1x128xf32> to vector<16x128xf32>
    %56 = arith.addf %55, %54 : vector<16x128xf32>
    %57 = arith.mulf %22, %56 : vector<16x128xf32>
    %58 = arith.addf %57, %1 : vector<16x128xf32>
    %cst_14 = arith.constant 0.000000e+00 : f32
    %59 = vector.broadcast %cst_14 : f32 to vector<16x128xf32>
    %60 = arith.subf %59, %58 : vector<16x128xf32>
    %cst_15 = arith.constant 0.000000e+00 : f32
    %61 = vector.broadcast %cst_15 : f32 to vector<16x128xf32>
    %62 = arith.maximumf %60, %61 : vector<16x128xf32>
    %63 = vector.broadcast %cst_15 : f32 to vector<16x128xf32>
    %64 = arith.subf %60, %63 : vector<16x128xf32>
    %65 = arith.cmpf one, %64, %64 : vector<16x128xf32>
    %66 = vector.broadcast %cst_15 : f32 to vector<16x128xf32>
    %67 = arith.addf %60, %66 : vector<16x128xf32>
    %68 = math.absf %64 : vector<16x128xf32>
    %cst_16 = arith.constant 0.000000e+00 : f32
    %69 = vector.broadcast %cst_16 : f32 to vector<16x128xf32>
    %70 = arith.subf %69, %68 : vector<16x128xf32>
    %71 = math.exp %70 : vector<16x128xf32>
    %72 = math.log1p %71 : vector<16x128xf32>
    %73 = arith.addf %62, %72 : vector<16x128xf32>
    %74 = arith.select %65, %67, %73 : vector<16x128xi1>, vector<16x128xf32>
    %cst_17 = arith.constant 0.000000e+00 : f32
    %75 = vector.broadcast %cst_17 : f32 to vector<16x128xf32>
    %76 = arith.subf %75, %74 : vector<16x128xf32>
    %77 = math.exp %76 : vector<16x128xf32>
    %78 = math.log %22 : vector<16x128xf32>
    %cst_18 = arith.constant 2.000000e+00 : f32
    %79 = vector.broadcast %cst_18 : f32 to vector<16x128xf32>
    %80 = arith.mulf %79, %74 : vector<16x128xf32>
    %81 = arith.addf %80, %58 : vector<16x128xf32>
    %cst_19 = arith.constant 2.000000e-06 : f32
    %82 = vector.broadcast %cst_19 : f32 to vector<16x128xf32>
    %83 = arith.addf %81, %82 : vector<16x128xf32>
    %84 = arith.subf %78, %83 : vector<16x128xf32>
    %cst_20 = arith.constant dense<0xFF800000> : vector<128xf32>
    %85 = vector.multi_reduction <maximumf>, %84, %cst_20 [0] : vector<16x128xf32> to vector<128xf32>
    %86 = vector.shape_cast %85 : vector<128xf32> to vector<1x128xf32>
    %87 = vector.broadcast %86 : vector<1x128xf32> to vector<16x128xf32>
    %88 = arith.subf %84, %87 : vector<16x128xf32>
    %89 = math.exp %88 : vector<16x128xf32>
    %cst_21 = arith.constant dense<0xFF800000> : vector<128xf32>
    %90 = vector.multi_reduction <maximumf>, %2, %cst_21 [0] : vector<16x128xf32> to vector<128xf32>
    %91 = vector.shape_cast %90 : vector<128xf32> to vector<1x128xf32>
    %92 = vector.broadcast %91 : vector<1x128xf32> to vector<16x128xf32>
    %93 = arith.subf %2, %92 : vector<16x128xf32>
    %94 = math.exp %93 : vector<16x128xf32>
    %95 = vector.extract_strided_slice %6 {offsets = [0, 0], sizes = [16, 1], strides = [1, 1]} : vector<16x3xf32> to vector<16x1xf32>
    %96 = vector.broadcast %95 : vector<16x1xf32> to vector<16x128xf32>
    %97 = arith.mulf %96, %94 : vector<16x128xf32>
    %cst_22 = arith.constant dense<0.000000e+00> : vector<128xf32>
    %98 = vector.multi_reduction <add>, %97, %cst_22 [0] : vector<16x128xf32> to vector<128xf32>
    %99 = vector.shape_cast %98 : vector<128xf32> to vector<1x128xf32>
    %100 = arith.mulf %97, %77 : vector<16x128xf32>
    %cst_23 = arith.constant dense<0.000000e+00> : vector<128xf32>
    %101 = vector.multi_reduction <add>, %100, %cst_23 [0] : vector<16x128xf32> to vector<128xf32>
    %102 = vector.shape_cast %101 : vector<128xf32> to vector<1x128xf32>
    %103 = arith.mulf %97, %89 : vector<16x128xf32>
    %cst_24 = arith.constant dense<0.000000e+00> : vector<128xf32>
    %104 = vector.multi_reduction <add>, %103, %cst_24 [0] : vector<16x128xf32> to vector<128xf32>
    %105 = vector.shape_cast %104 : vector<128xf32> to vector<1x128xf32>
    %cst_25 = arith.constant 1.000000e+00 : f32
    %106 = vector.broadcast %cst_25 : f32 to vector<1x128xf32>
    %107 = arith.divf %106, %99 : vector<1x128xf32>
    %108 = arith.mulf %102, %107 : vector<1x128xf32>
    %cst_26 = arith.constant 0.999998986 : f32
    %109 = vector.broadcast %cst_26 : f32 to vector<1x128xf32>
    %110 = arith.mulf %108, %109 : vector<1x128xf32>
    %cst_27 = arith.constant 5.000000e-07 : f32
    %111 = vector.broadcast %cst_27 : f32 to vector<1x128xf32>
    %112 = arith.addf %110, %111 : vector<1x128xf32>
    %113 = math.log %112 : vector<1x128xf32>
    %cst_28 = arith.constant 1.000000e+00 : f32
    %114 = vector.broadcast %cst_28 : f32 to vector<1x128xf32>
    %115 = arith.subf %114, %112 : vector<1x128xf32>
    %116 = math.log %115 : vector<1x128xf32>
    %117 = arith.subf %113, %116 : vector<1x128xf32>
    %c0_29 = arith.constant 0 : index
    %c0_30 = arith.constant 0 : index
    %118 = vector.load %arg4[%c0_29, %c0_30] : memref<6x128xf32, #tpu.memory_space<vmem>>, vector<1x128xf32>
    tpu.vector_store %arg4[%c0_29, %c0_30], %117 {strides = array<i32>} : memref<6x128xf32, #tpu.memory_space<vmem>>, vector<1x128xf32>,
    %119 = arith.mulf %105, %107 : vector<1x128xf32>
    %120 = math.log %119 : vector<1x128xf32>
    %cst_31 = arith.constant -1.00000045E-6 : f32
    %121 = vector.broadcast %cst_31 : f32 to vector<1x128xf32>
    %122 = arith.addf %86, %121 : vector<1x128xf32>
    %123 = arith.addf %120, %122 : vector<1x128xf32>
    %124 = arith.addf %113, %116 : vector<1x128xf32>
    %125 = arith.subf %123, %124 : vector<1x128xf32>
    %c3 = arith.constant 3 : index
    %c0_32 = arith.constant 0 : index
    %126 = vector.load %arg4[%c3, %c0_32] : memref<6x128xf32, #tpu.memory_space<vmem>>, vector<1x128xf32>
    tpu.vector_store %arg4[%c3, %c0_32], %125 {strides = array<i32>} : memref<6x128xf32, #tpu.memory_space<vmem>>, vector<1x128xf32>,
    %127 = vector.extract_strided_slice %6 {offsets = [0, 1], sizes = [16, 1], strides = [1, 1]} : vector<16x3xf32> to vector<16x1xf32>
    %128 = vector.broadcast %127 : vector<16x1xf32> to vector<16x128xf32>
    %129 = arith.mulf %128, %94 : vector<16x128xf32>
    %cst_33 = arith.constant dense<0.000000e+00> : vector<128xf32>
    %130 = vector.multi_reduction <add>, %129, %cst_33 [0] : vector<16x128xf32> to vector<128xf32>
    %131 = vector.shape_cast %130 : vector<128xf32> to vector<1x128xf32>
    %132 = arith.mulf %129, %77 : vector<16x128xf32>
    %cst_34 = arith.constant dense<0.000000e+00> : vector<128xf32>
    %133 = vector.multi_reduction <add>, %132, %cst_34 [0] : vector<16x128xf32> to vector<128xf32>
    %134 = vector.shape_cast %133 : vector<128xf32> to vector<1x128xf32>
    %135 = arith.mulf %129, %89 : vector<16x128xf32>
    %cst_35 = arith.constant dense<0.000000e+00> : vector<128xf32>
    %136 = vector.multi_reduction <add>, %135, %cst_35 [0] : vector<16x128xf32> to vector<128xf32>
    %137 = vector.shape_cast %136 : vector<128xf32> to vector<1x128xf32>
    %cst_36 = arith.constant 1.000000e+00 : f32
    %138 = vector.broadcast %cst_36 : f32 to vector<1x128xf32>
    %139 = arith.divf %138, %131 : vector<1x128xf32>
    %140 = arith.mulf %134, %139 : vector<1x128xf32>
    %cst_37 = arith.constant 0.999998986 : f32
    %141 = vector.broadcast %cst_37 : f32 to vector<1x128xf32>
    %142 = arith.mulf %140, %141 : vector<1x128xf32>
    %cst_38 = arith.constant 5.000000e-07 : f32
    %143 = vector.broadcast %cst_38 : f32 to vector<1x128xf32>
    %144 = arith.addf %142, %143 : vector<1x128xf32>
    %145 = math.log %144 : vector<1x128xf32>
    %cst_39 = arith.constant 1.000000e+00 : f32
    %146 = vector.broadcast %cst_39 : f32 to vector<1x128xf32>
    %147 = arith.subf %146, %144 : vector<1x128xf32>
    %148 = math.log %147 : vector<1x128xf32>
    %149 = arith.subf %145, %148 : vector<1x128xf32>
    %c1 = arith.constant 1 : index
    %c0_40 = arith.constant 0 : index
    %150 = vector.load %arg4[%c1, %c0_40] : memref<6x128xf32, #tpu.memory_space<vmem>>, vector<1x128xf32>
    tpu.vector_store %arg4[%c1, %c0_40], %149 {strides = array<i32>} : memref<6x128xf32, #tpu.memory_space<vmem>>, vector<1x128xf32>,
    %151 = arith.mulf %137, %139 : vector<1x128xf32>
    %152 = math.log %151 : vector<1x128xf32>
    %cst_41 = arith.constant -1.00000045E-6 : f32
    %153 = vector.broadcast %cst_41 : f32 to vector<1x128xf32>
    %154 = arith.addf %86, %153 : vector<1x128xf32>
    %155 = arith.addf %152, %154 : vector<1x128xf32>
    %156 = arith.addf %145, %148 : vector<1x128xf32>
    %157 = arith.subf %155, %156 : vector<1x128xf32>
    %c4 = arith.constant 4 : index
    %c0_42 = arith.constant 0 : index
    %158 = vector.load %arg4[%c4, %c0_42] : memref<6x128xf32, #tpu.memory_space<vmem>>, vector<1x128xf32>
    tpu.vector_store %arg4[%c4, %c0_42], %157 {strides = array<i32>} : memref<6x128xf32, #tpu.memory_space<vmem>>, vector<1x128xf32>,
    %159 = vector.extract_strided_slice %6 {offsets = [0, 2], sizes = [16, 1], strides = [1, 1]} : vector<16x3xf32> to vector<16x1xf32>
    %160 = vector.broadcast %159 : vector<16x1xf32> to vector<16x128xf32>
    %161 = arith.mulf %160, %94 : vector<16x128xf32>
    %cst_43 = arith.constant dense<0.000000e+00> : vector<128xf32>
    %162 = vector.multi_reduction <add>, %161, %cst_43 [0] : vector<16x128xf32> to vector<128xf32>
    %163 = vector.shape_cast %162 : vector<128xf32> to vector<1x128xf32>
    %164 = arith.mulf %161, %77 : vector<16x128xf32>
    %cst_44 = arith.constant dense<0.000000e+00> : vector<128xf32>
    %165 = vector.multi_reduction <add>, %164, %cst_44 [0] : vector<16x128xf32> to vector<128xf32>
    %166 = vector.shape_cast %165 : vector<128xf32> to vector<1x128xf32>
    %167 = arith.mulf %161, %89 : vector<16x128xf32>
    %cst_45 = arith.constant dense<0.000000e+00> : vector<128xf32>
    %168 = vector.multi_reduction <add>, %167, %cst_45 [0] : vector<16x128xf32> to vector<128xf32>
    %169 = vector.shape_cast %168 : vector<128xf32> to vector<1x128xf32>
    %cst_46 = arith.constant 1.000000e+00 : f32
    %170 = vector.broadcast %cst_46 : f32 to vector<1x128xf32>
    %171 = arith.divf %170, %163 : vector<1x128xf32>
    %172 = arith.mulf %166, %171 : vector<1x128xf32>
    %cst_47 = arith.constant 0.999998986 : f32
    %173 = vector.broadcast %cst_47 : f32 to vector<1x128xf32>
    %174 = arith.mulf %172, %173 : vector<1x128xf32>
    %cst_48 = arith.constant 5.000000e-07 : f32
    %175 = vector.broadcast %cst_48 : f32 to vector<1x128xf32>
    %176 = arith.addf %174, %175 : vector<1x128xf32>
    %177 = math.log %176 : vector<1x128xf32>
    %cst_49 = arith.constant 1.000000e+00 : f32
    %178 = vector.broadcast %cst_49 : f32 to vector<1x128xf32>
    %179 = arith.subf %178, %176 : vector<1x128xf32>
    %180 = math.log %179 : vector<1x128xf32>
    %181 = arith.subf %177, %180 : vector<1x128xf32>
    %c2 = arith.constant 2 : index
    %c0_50 = arith.constant 0 : index
    %182 = vector.load %arg4[%c2, %c0_50] : memref<6x128xf32, #tpu.memory_space<vmem>>, vector<1x128xf32>
    tpu.vector_store %arg4[%c2, %c0_50], %181 {strides = array<i32>} : memref<6x128xf32, #tpu.memory_space<vmem>>, vector<1x128xf32>,
    %183 = arith.mulf %169, %171 : vector<1x128xf32>
    %184 = math.log %183 : vector<1x128xf32>
    %cst_51 = arith.constant -1.00000045E-6 : f32
    %185 = vector.broadcast %cst_51 : f32 to vector<1x128xf32>
    %186 = arith.addf %86, %185 : vector<1x128xf32>
    %187 = arith.addf %184, %186 : vector<1x128xf32>
    %188 = arith.addf %177, %180 : vector<1x128xf32>
    %189 = arith.subf %187, %188 : vector<1x128xf32>
    %c5 = arith.constant 5 : index
    %c0_52 = arith.constant 0 : index
    %190 = vector.load %arg4[%c5, %c0_52] : memref<6x128xf32, #tpu.memory_space<vmem>>, vector<1x128xf32>
    tpu.vector_store %arg4[%c5, %c0_52], %189 {strides = array<i32>} : memref<6x128xf32, #tpu.memory_space<vmem>>, vector<1x128xf32>,
    return
  }
  func.func @transform_0(%arg0: i32) -> (i32, i32) {
    %c0_i32 = arith.constant 0 : i32
    %c0_i32_0 = arith.constant 0 : i32
    return %c0_i32, %arg0 : i32, i32
  }
  func.func @transform_1(%arg0: i32) -> (i32, i32) {
    %c0_i32 = arith.constant 0 : i32
    %c0_i32_0 = arith.constant 0 : i32
    %c0_i32_1 = arith.constant 0 : i32
    return %c0_i32, %c0_i32_0 : i32, i32
  }
  func.func @transform_2(%arg0: i32) -> (i32, i32) {
    %c0_i32 = arith.constant 0 : i32
    %c0_i32_0 = arith.constant 0 : i32
    %c0_i32_1 = arith.constant 0 : i32
    return %c0_i32, %c0_i32_0 : i32, i32
  }
  func.func @transform_3(%arg0: i32) -> (i32, i32) {
    %c0_i32 = arith.constant 0 : i32
    %c0_i32_0 = arith.constant 0 : i32
    return %c0_i32, %arg0 : i32, i32
  }
}

</mosaic_0001>

<llo_original>
// kernel: tpu_custom_call.1
$region0: #{tpu_custom_call.1}
  #allocation0 [shape = 'u32[]', space=smem, size = 0x4, offset = 0x4, fixed_abs, tag = 'smem constant byte address 0x4 - core index']
  #allocation1 [shape = 'u32[144,128]{1,0:T(1,128)}', space=vmem, size = 0x12000, scoped, tag = 'internal scratch']
  %s0 = inlined_call_operand.hbm [shape: f32[64,128], index: 0, kind: input, shape index: {}]
  %s1 = inlined_call_operand.vmem [shape: f32[16,2], index: 1, kind: input, shape index: {}]
  %s2 = inlined_call_operand.vmem [shape: f32[16,3], index: 2, kind: input, shape index: {}]
  %s3 = inlined_call_operand.hbm [shape: f32[6,128], index: 3, kind: output, shape index: {}]
  %s4 = sld [smem:[#allocation0]]
  $region26: #{tpu_custom_call.1} parent=0
    _
  %s6 = ssub.s32 1, %s4
  %s7 = scalar_select 0, %s6, %s4
  $region1: #{tpu_custom_call.1} parent=0
    #allocation2 [shape = 'u8[32768]{0}', space=vmem, size = 0x8000, scoped, tag = 'input window, operand 0, single buffered']
    #allocation3 [shape = 's32[1]{0}', space=sflag, size = 0x4, scoped, tag = 'scoped memory for tpu_custom_call.1']
    #allocation4 [shape = 's32[1]{0}', space=sflag, size = 0x4, scoped, tag = 'scoped memory for tpu_custom_call.1']
    #allocation5 [shape = 'u8[4096]{0}', space=vmem, size = 0x1000, scoped, tag = 'output window, operand 0, single buffered']
    %8 = vsyncpa [#allocation3], 0
    %9 = vsyncpa [#allocation4], 0
    // Predicated region
    $region2: #{tpu_custom_call.1} parent=1 // pred_check
      _
    $region3: #{tpu_custom_call.1} parent=1 // pred_check_branch
      %11 = sbr.rel (0) target = $region5
    $region4: #{tpu_custom_call.1} parent=1 // pred_region
      %s13 = ssub.s32 1024, 1024
      %14 = vsyncadd [#allocation3], %s13
      %s15 = sshll.u32 [#allocation2], 4
      %s16 = int_to_ptr.vmem [resolvable:$true] %s15
      %21 = dma.hbm_to_vmem [thread:$0]  %s0, 1024, %s16, [#allocation3], 128, 128, 8
    $region5: #{tpu_custom_call.1} parent=1 // pred_fallthru
      _
    // Predicated region
    $region6: #{tpu_custom_call.1} parent=1 // pred_check
      _
    $region7: #{tpu_custom_call.1} parent=1 // pred_check_branch
      %23 = sbr.rel (0) target = $region9
    $region8: #{tpu_custom_call.1} parent=1 // pred_region
      _
    $region9: #{tpu_custom_call.1} parent=1 // pred_fallthru
      _
    // Predicated region
    $region10: #{tpu_custom_call.1} parent=1 // pred_check
      _
    $region11: #{tpu_custom_call.1} parent=1 // pred_check_branch
      %25 = sbr.rel (0) target = $region13
    $region12: #{tpu_custom_call.1} parent=1 // pred_region
      _
    $region13: #{tpu_custom_call.1} parent=1 // pred_fallthru
      _
    // Predicated region
    $region14: #{tpu_custom_call.1} parent=1 // pred_check
      _
    $region15: #{tpu_custom_call.1} parent=1 // pred_check_branch
      %27 = sbr.rel (0) target = $region17
    $region16: #{tpu_custom_call.1} parent=1 // pred_region
      %28 = dma.done [#allocation3], 1024
    $region17: #{tpu_custom_call.1} parent=1 // pred_fallthru
      _
    %v29 = vld [vmem:[#allocation2] sm:$0xff]
    %v30 = vld [vmem:[#allocation2 + $0x8] sm:$0xff]
    %v31 = vld [vmem:[#allocation2 + $0x10] sm:$0xff]
    %v32 = vld [vmem:[#allocation2 + $0x18] sm:$0xff]
    %v33 = vld [vmem:[#allocation2 + $0x20] sm:$0xff]
    %v34 = vld [vmem:[#allocation2 + $0x28] sm:$0xff]
    %v35 = vld [vmem:[#allocation2 + $0x30] sm:$0x3]
    %v36 = vld [vmem:[#allocation2 + $0x38] sm:$0x3]
    %v37 = vld [vmem:[%s1] sm:$0xff]
    %v38 = vld [vmem:[%s1 + $0x8] sm:$0xff]
    %v39 = vld [vmem:[%s2] sm:$0xff]
    %v40 = vld [vmem:[%s2 + $0x8] sm:$0xff]
    %v41 = vadd.f32 %v29, 0.54132324
    %v42 = vadd.f32 %v30, 0.54132324
    %v43 = vmax.f32 %v41, 0.0
    %v44 = vmax.f32 %v42, 0.0
    %vm45 = vcmp.ne.f32.partialorder %v41, %v41
    %vm46 = vcmp.ne.f32.partialorder %v42, %v42
    %v47 = vadd.f32 %v41, 0.0
    %v48 = vadd.f32 %v42, 0.0
    %v49 = vand.u32 2147483647, %v41
    %v50 = vand.u32 2147483647, %v42
    %v51 = vsub.f32 0.0, %v49
    %v52 = vsub.f32 0.0, %v50
    %v53 = vmul.f32 %v51, 1.442695
    %v54 = vpow.pop %v53
    %v55 = vmul.f32 %v52, 1.442695
    %v56 = vpow.pop %v55
    %v57 = vadd.f32 %v54, 1.0
    %v58 = vlog2.pop %v57
    %v59 = vmul.f32 %v58, 0.6931472
    %v60 = vmul.f32 -0.5, %v54
    %v61 = vadd.f32 %v60, 1.0
    %v62 = vmul.f32 %v61, %v54
    %v63 = vand.u32 2147483647, %v54
    %vm64 = vcmp.lt.f32.partialorder %v63, 0.0004427343
    %v65 = vsel %vm64, %v62, %v59
    %v66 = vadd.f32 %v56, 1.0
    %v67 = vlog2.pop %v66
    %v68 = vmul.f32 %v67, 0.6931472
    %v69 = vmul.f32 -0.5, %v56
    %v70 = vadd.f32 %v69, 1.0
    %v71 = vmul.f32 %v70, %v56
    %v72 = vand.u32 2147483647, %v56
    %vm73 = vcmp.lt.f32.partialorder %v72, 0.0004427343
    %v74 = vsel %vm73, %v71, %v68
    %v75 = vadd.f32 %v43, %v65
    %v76 = vadd.f32 %v44, %v74
    %v77 = vsel %vm45, %v47, %v75
    %v78 = vsel %vm46, %v48, %v76
    %81 = vrot.lane.b32.xlu0 %v37, 1
    %v82 = vpop.permute.xlu0 %81
    %83 = vrot.lane.b32.xlu0 %v38, 1
    %v84 = vpop.permute.xlu0 %83
    %v87 = vsub.f32 %v37, %v82
    %v88 = vsub.f32 %v38, %v84
    %v90 = vrot.slane %v35, 7
    %v92 = vsub.f32 %v35, %v90
    %94 = vset.pattern.permute.xlu0 1
    %95 = vperm.xlu0 %94, %v87
    %v96 = vpop.permute.xlu0 %95
    %99 = vset.pattern.permute.xlu0 1
    %100 = vperm.xlu0 %99, %v88
    %v101 = vpop.permute.xlu0 %100
    %v103 = vlaneseq
    %v104 = vshrl.u32 %v103, 7
    %v105 = vsub.s32 1, %v104
    %v106 = vrot.slane %v92, %v105
    %v107 = vadd.f32 %v96, %v106
    %v108 = vadd.f32 %v101, %v106
    %v109 = vmax.f32 %v107, 0.0
    %v110 = vmax.f32 %v108, 0.0
    %vm111 = vcmp.ne.f32.partialorder %v107, %v107
    %vm112 = vcmp.ne.f32.partialorder %v108, %v108
    %v113 = vadd.f32 %v107, 0.0
    %v114 = vadd.f32 %v108, 0.0
    %v115 = vand.u32 2147483647, %v107
    %v116 = vand.u32 2147483647, %v108
    %v117 = vsub.f32 0.0, %v115
    %v118 = vsub.f32 0.0, %v116
    %v119 = vmul.f32 %v117, 1.442695
    %v120 = vpow.pop %v119
    %v121 = vmul.f32 %v118, 1.442695
    %v122 = vpow.pop %v121
    %v123 = vadd.f32 %v120, 1.0
    %v124 = vlog2.pop %v123
    %v125 = vmul.f32 %v124, 0.6931472
    %v126 = vmul.f32 -0.5, %v120
    %v127 = vadd.f32 %v126, 1.0
    %v128 = vmul.f32 %v127, %v120
    %v129 = vand.u32 2147483647, %v120
    %vm130 = vcmp.lt.f32.partialorder %v129, 0.0004427343
    %v131 = vsel %vm130, %v128, %v125
    %v132 = vadd.f32 %v122, 1.0
    %v133 = vlog2.pop %v132
    %v134 = vmul.f32 %v133, 0.6931472
    %v135 = vmul.f32 -0.5, %v122
    %v136 = vadd.f32 %v135, 1.0
    %v137 = vmul.f32 %v136, %v122
    %v138 = vand.u32 2147483647, %v122
    %vm139 = vcmp.lt.f32.partialorder %v138, 0.0004427343
    %v140 = vsel %vm139, %v137, %v134
    %v141 = vadd.f32 %v109, %v131
    %v142 = vadd.f32 %v110, %v140
    %v143 = vsel %vm111, %v113, %v141
    %v144 = vsel %vm112, %v114, %v142
    %v145 = vsub.f32 0.0, %v143
    %v146 = vsub.f32 0.0, %v144
    %v147 = vmul.f32 %v145, 1.442695
    %v148 = vpow.pop %v147
    %v149 = vmul.f32 %v146, 1.442695
    %v150 = vpow.pop %v149
    %v152 = vrot.slane %v36, 1
    %v154 = vsub.f32 %v36, %v152
    %v155 = vlaneseq
    %v156 = vshrl.u32 %v155, 7
    %v157 = vsub.s32 0, %v156
    %v158 = vrot.slane %v154, %v157
    %v159 = vmul.f32 %v148, %v158
    %v160 = vmul.f32 %v150, %v158
    %v161 = vlaneseq
    %v162 = vshrl.u32 %v161, 7
    %v163 = vsub.s32 1, %v162
    %v164 = vrot.slane %v36, %v163
    %v165 = vadd.f32 %v164, %v159
    %v166 = vadd.f32 %v164, %v160
    %v167 = vmul.f32 %v77, %v165
    %v168 = vmul.f32 %v78, %v166
    %v169 = vadd.f32 %v167, %v31
    %v170 = vadd.f32 %v168, %v32
    %v171 = vsub.f32 0.0, %v169
    %v172 = vsub.f32 0.0, %v170
    %v173 = vmax.f32 %v171, 0.0
    %v174 = vmax.f32 %v172, 0.0
    %vm175 = vcmp.ne.f32.partialorder %v171, %v171
    %vm176 = vcmp.ne.f32.partialorder %v172, %v172
    %v177 = vadd.f32 %v171, 0.0
    %v178 = vadd.f32 %v172, 0.0
    %v179 = vand.u32 2147483647, %v171
    %v180 = vand.u32 2147483647, %v172
    %v181 = vsub.f32 0.0, %v179
    %v182 = vsub.f32 0.0, %v180
    %v183 = vmul.f32 %v181, 1.442695
    %v184 = vpow.pop %v183
    %v185 = vmul.f32 %v182, 1.442695
    %v186 = vpow.pop %v185
    %v187 = vadd.f32 %v184, 1.0
    %v188 = vlog2.pop %v187
    %v189 = vmul.f32 %v188, 0.6931472
    %v190 = vmul.f32 -0.5, %v184
    %v191 = vadd.f32 %v190, 1.0
    %v192 = vmul.f32 %v191, %v184
    %v193 = vand.u32 2147483647, %v184
    %vm194 = vcmp.lt.f32.partialorder %v193, 0.0004427343
    %v195 = vsel %vm194, %v192, %v189
    %v196 = vadd.f32 %v186, 1.0
    %v197 = vlog2.pop %v196
    %v198 = vmul.f32 %v197, 0.6931472
    %v199 = vmul.f32 -0.5, %v186
    %v200 = vadd.f32 %v199, 1.0
    %v201 = vmul.f32 %v200, %v186
    %v202 = vand.u32 2147483647, %v186
    %vm203 = vcmp.lt.f32.partialorder %v202, 0.0004427343
    %v204 = vsel %vm203, %v201, %v198
    %v205 = vadd.f32 %v173, %v195
    %v206 = vadd.f32 %v174, %v204
    %v207 = vsel %vm175, %v177, %v205
    %v208 = vsel %vm176, %v178, %v206
    %v209 = vsub.f32 0.0, %v207
    %v210 = vsub.f32 0.0, %v208
    %v211 = vmul.f32 %v209, 1.442695
    %v212 = vpow.pop %v211
    %v213 = vmul.f32 %v210, 1.442695
    %v214 = vpow.pop %v213
    %v215 = vlog2.pop %v77
    %v216 = vmul.f32 %v215, 0.6931472
    %v217 = vlog2.pop %v78
    %v218 = vmul.f32 %v217, 0.6931472
    %v219 = vmul.f32 %v207, 2.0
    %v220 = vmul.f32 %v208, 2.0
    %v221 = vadd.f32 %v219, %v169
    %v222 = vadd.f32 %v220, %v170
    %v223 = vadd.f32 %v221, 2e-06
    %v224 = vadd.f32 %v222, 2e-06
    %v225 = vsub.f32 %v216, %v223
    %v226 = vsub.f32 %v218, %v224
    %v227 = vmax.f32 %v225, %v226
    %v228 = vrot.slane %v227, 4
    %v229 = vmax.f32 %v227, %v228
    %v230 = vrot.slane %v229, 2
    %v231 = vmax.f32 %v229, %v230
    %v232 = vrot.slane %v231, 1
    %v233 = vmax.f32 %v231, %v232
    %v234 = vsub.f32 %v225, %v233
    %v235 = vsub.f32 %v226, %v233
    %v236 = vmul.f32 %v234, 1.442695
    %v237 = vpow.pop %v236
    %v238 = vmul.f32 %v235, 1.442695
    %v239 = vpow.pop %v238
    %v240 = vmax.f32 %v33, %v34
    %v241 = vrot.slane %v240, 4
    %v242 = vmax.f32 %v240, %v241
    %v243 = vrot.slane %v242, 2
    %v244 = vmax.f32 %v242, %v243
    %v245 = vrot.slane %v244, 1
    %v246 = vmax.f32 %v244, %v245
    %v247 = vsub.f32 %v33, %v246
    %v248 = vsub.f32 %v34, %v246
    %v249 = vmul.f32 %v247, 1.442695
    %v250 = vpow.pop %v249
    %v251 = vmul.f32 %v248, 1.442695
    %v252 = vpow.pop %v251
    %254 = vset.pattern.permute.xlu0 0
    %255 = vperm.xlu0 %254, %v39
    %v256 = vpop.permute.xlu0 %255
    %259 = vset.pattern.permute.xlu0 0
    %260 = vperm.xlu0 %259, %v40
    %v261 = vpop.permute.xlu0 %260
    %v263 = vmul.f32 %v256, %v250
    %v264 = vmul.f32 %v261, %v252
    %v265 = vadd.f32 %v263, %v264
    %v266 = vrot.slane %v265, 4
    %v267 = vadd.f32 %v265, %v266
    %v268 = vrot.slane %v267, 2
    %v269 = vadd.f32 %v267, %v268
    %v270 = vrot.slane %v269, 1
    %v271 = vadd.f32 %v269, %v270
    %v272 = vmul.f32 %v263, %v212
    %v273 = vmul.f32 %v264, %v214
    %v274 = vadd.f32 %v272, %v273
    %v275 = vrot.slane %v274, 4
    %v276 = vadd.f32 %v274, %v275
    %v277 = vrot.slane %v276, 2
    %v278 = vadd.f32 %v276, %v277
    %v279 = vrot.slane %v278, 1
    %v280 = vadd.f32 %v278, %v279
    %v281 = vmul.f32 %v263, %v237
    %v282 = vmul.f32 %v264, %v239
    %v283 = vadd.f32 %v281, %v282
    %v284 = vrot.slane %v283, 4
    %v285 = vadd.f32 %v283, %v284
    %v286 = vrot.slane %v285, 2
    %v287 = vadd.f32 %v285, %v286
    %v288 = vrot.slane %v287, 1
    %v289 = vadd.f32 %v287, %v288
    %v290 = vrcp.pop %v271
    %v291 = vmul.f32 1.0, %v290
    %v292 = vmul.f32 %v280, %v291
    %v293 = vmul.f32 %v292, 0.999999
    %v294 = vadd.f32 %v293, 5e-07
    %v295 = vlog2.pop %v294
    %v296 = vmul.f32 %v295, 0.6931472
    %v297 = vsub.f32 1.0, %v294
    %v298 = vlog2.pop %v297
    %v299 = vmul.f32 %v298, 0.6931472
    %v300 = vsub.f32 %v296, %v299
    %301 = vst [vmem:[#allocation5] sm:$0x1] %v300
    %v302 = vmul.f32 %v289, %v291
    %v303 = vlog2.pop %v302
    %v304 = vmul.f32 %v303, 0.6931472
    %v305 = vadd.f32 %v233, -1.0000005e-06
    %v306 = vadd.f32 %v304, %v305
    %v307 = vadd.f32 %v296, %v299
    %v308 = vsub.f32 %v306, %v307
    %309 = vst [vmem:[#allocation5 + $0x3] sm:$0x1] %v308
    %310 = vset.pattern.permute.xlu0 1
    %311 = vperm.xlu0 %310, %v39
    %v312 = vpop.permute.xlu0 %311
    %314 = vset.pattern.permute.xlu0 1
    %315 = vperm.xlu0 %314, %v40
    %v316 = vpop.permute.xlu0 %315
    %v318 = vmul.f32 %v312, %v250
    %v319 = vmul.f32 %v316, %v252
    %v320 = vadd.f32 %v318, %v319
    %v321 = vrot.slane %v320, 4
    %v322 = vadd.f32 %v320, %v321
    %v323 = vrot.slane %v322, 2
    %v324 = vadd.f32 %v322, %v323
    %v325 = vrot.slane %v324, 1
    %v326 = vadd.f32 %v324, %v325
    %v327 = vmul.f32 %v318, %v212
    %v328 = vmul.f32 %v319, %v214
    %v329 = vadd.f32 %v327, %v328
    %v330 = vrot.slane %v329, 4
    %v331 = vadd.f32 %v329, %v330
    %v332 = vrot.slane %v331, 2
    %v333 = vadd.f32 %v331, %v332
    %v334 = vrot.slane %v333, 1
    %v335 = vadd.f32 %v333, %v334
    %v336 = vmul.f32 %v318, %v237
    %v337 = vmul.f32 %v319, %v239
    %v338 = vadd.f32 %v336, %v337
    %v339 = vrot.slane %v338, 4
    %v340 = vadd.f32 %v338, %v339
    %v341 = vrot.slane %v340, 2
    %v342 = vadd.f32 %v340, %v341
    %v343 = vrot.slane %v342, 1
    %v344 = vadd.f32 %v342, %v343
    %v345 = vrcp.pop %v326
    %v346 = vmul.f32 1.0, %v345
    %v347 = vmul.f32 %v335, %v346
    %v348 = vmul.f32 %v347, 0.999999
    %v349 = vadd.f32 %v348, 5e-07
    %v350 = vlog2.pop %v349
    %v351 = vmul.f32 %v350, 0.6931472
    %v352 = vsub.f32 1.0, %v349
    %v353 = vlog2.pop %v352
    %v354 = vmul.f32 %v353, 0.6931472
    %v355 = vsub.f32 %v351, %v354
    %356 = vst [vmem:[#allocation5 + $0x1] sm:$0x1] %v355
    %v357 = vmul.f32 %v344, %v346
    %v358 = vlog2.pop %v357
    %v359 = vmul.f32 %v358, 0.6931472
    %v360 = vadd.f32 %v359, %v305
    %v361 = vadd.f32 %v351, %v354
    %v362 = vsub.f32 %v360, %v361
    %363 = vst [vmem:[#allocation5 + $0x4] sm:$0x1] %v362
    %364 = vset.pattern.permute.xlu0 2
    %365 = vperm.xlu0 %364, %v39
    %v366 = vpop.permute.xlu0 %365
    %368 = vset.pattern.permute.xlu0 2
    %369 = vperm.xlu0 %368, %v40
    %v370 = vpop.permute.xlu0 %369
    %v372 = vmul.f32 %v366, %v250
    %v373 = vmul.f32 %v370, %v252
    %v374 = vadd.f32 %v372, %v373
    %v375 = vrot.slane %v374, 4
    %v376 = vadd.f32 %v374, %v375
    %v377 = vrot.slane %v376, 2
    %v378 = vadd.f32 %v376, %v377
    %v379 = vrot.slane %v378, 1
    %v380 = vadd.f32 %v378, %v379
    %v381 = vmul.f32 %v372, %v212
    %v382 = vmul.f32 %v373, %v214
    %v383 = vadd.f32 %v381, %v382
    %v384 = vrot.slane %v383, 4
    %v385 = vadd.f32 %v383, %v384
    %v386 = vrot.slane %v385, 2
    %v387 = vadd.f32 %v385, %v386
    %v388 = vrot.slane %v387, 1
    %v389 = vadd.f32 %v387, %v388
    %v390 = vmul.f32 %v372, %v237
    %v391 = vmul.f32 %v373, %v239
    %v392 = vadd.f32 %v390, %v391
    %v393 = vrot.slane %v392, 4
    %v394 = vadd.f32 %v392, %v393
    %v395 = vrot.slane %v394, 2
    %v396 = vadd.f32 %v394, %v395
    %v397 = vrot.slane %v396, 1
    %v398 = vadd.f32 %v396, %v397
    %v399 = vrcp.pop %v380
    %v400 = vmul.f32 1.0, %v399
    %v401 = vmul.f32 %v389, %v400
    %v402 = vmul.f32 %v401, 0.999999
    %v403 = vadd.f32 %v402, 5e-07
    %v404 = vlog2.pop %v403
    %v405 = vmul.f32 %v404, 0.6931472
    %v406 = vsub.f32 1.0, %v403
    %v407 = vlog2.pop %v406
    %v408 = vmul.f32 %v407, 0.6931472
    %v409 = vsub.f32 %v405, %v408
    %410 = vst [vmem:[#allocation5 + $0x2] sm:$0x1] %v409
    %v411 = vmul.f32 %v398, %v400
    %v412 = vlog2.pop %v411
    %v413 = vmul.f32 %v412, 0.6931472
    %v414 = vadd.f32 %v413, %v305
    %v415 = vadd.f32 %v405, %v408
    %v416 = vsub.f32 %v414, %v415
    %417 = vst [vmem:[#allocation5 + $0x5] sm:$0x1] %v416
    // Predicated region
    $region18: #{tpu_custom_call.1} parent=1 // pred_check
      _
    $region19: #{tpu_custom_call.1} parent=1 // pred_check_branch
      %419 = sbr.rel (0) target = $region21
    $region20: #{tpu_custom_call.1} parent=1 // pred_region
      %s421 = ssub.s32 128, 128
      %422 = vsyncadd [#allocation4], %s421
      %s424 = sshll.u32 [#allocation5], 4
      %s425 = int_to_ptr.vmem [resolvable:$true] %s424
      %427 = dma.vmem_to_hbm [thread:$0]  %s425, 128, %s3, [#allocation4]
    $region21: #{tpu_custom_call.1} parent=1 // pred_fallthru
      _
    // Predicated region
    $region22: #{tpu_custom_call.1} parent=1 // pred_check
      _
    $region23: #{tpu_custom_call.1} parent=1 // pred_check_branch
      %429 = sbr.rel (0) target = $region25
    $region24: #{tpu_custom_call.1} parent=1 // pred_region
      %430 = dma.done [#allocation4], 128
    $region25: #{tpu_custom_call.1} parent=1 // pred_fallthru
      _
    %431 = vsyncpa [#allocation3], 1
    %432 = vsyncpa [#allocation4], 1

</llo_original>
